<compile_context>
chip_gen: v7x
topology: tpu7x:2x2x1
jax: 0.10.0
libtpu: 0.0.40
codegen_flags: <defaults>
</compile_context>

<pallas_src>
import functools
import math

import jax
import jax.numpy as jnp
from jax import lax
from jax.experimental import pallas as pl
from jax.experimental.pallas import tpu as pltpu

_EPS2 = 1e-24  # (1e-12)^2  ->  matches F.normalize's  v / max(||v||, 1e-12)


def _arc_margin_kernel(label_ref, x_ref, w_ref, out_ref, *,
                       training, s, cos_m, sin_m, th, mm, easy_margin, c_tile):
    j = pl.program_id(0)

    # --- L2 normalization (rsqrt + multiply, all f32) ----------------------
    x = x_ref[...]                                            # (B, D)
    inv_x = lax.rsqrt(jnp.maximum(jnp.sum(x * x, axis=-1, keepdims=True), _EPS2))
    xn = (x * inv_x).astype(jnp.bfloat16)

    w = w_ref[...]                                            # (TC, D)
    inv_w = lax.rsqrt(jnp.maximum(jnp.sum(w * w, axis=-1, keepdims=True), _EPS2))
    wn = (w * inv_w).astype(jnp.bfloat16)

    # cosine = xn @ wn.T, expressed directly over the shared D axis so the
    # MXU is fed in native layout (no XLU transpose of the weight tile).
    cosine = lax.dot_general(
        xn, wn, dimension_numbers=(((1,), (1,)), ((), ())),
        preferred_element_type=jnp.float32)                   # (B, TC) f32

    if training:
        # Clamp before the sqrt: fp/bf16 rounding can push |cosine| past 1.
        sine = jnp.sqrt(jnp.maximum(1.0 - cosine * cosine, 0.0))
        phi = cosine * cos_m - sine * sin_m
        if easy_margin:
            phi = jnp.where(cosine > 0.0, phi, cosine)
        else:
            phi = jnp.where(cosine > th, phi, cosine - mm)
        # one_hot.scatter_(1, label, 1) blend == a single select on col==label.
        col = lax.broadcasted_iota(jnp.int32, cosine.shape, 1) + j * c_tile
        output = jnp.where(col == label_ref[...], phi, cosine)
    else:
        output = cosine

    out_ref[...] = (output * s).astype(out_ref.dtype)


def _round_up(a, b):
    return (a + b - 1) // b * b


def arc_margin_product(x, weight, label=None, *, training, s=64.0, m=0.2,
                       easy_margin=False, c_tile=512):
    """Pallas implementation of ArcMarginProduct.forward.

    x:      (B, in_feature) float32
    weight: (out_feature, in_feature) float32
    label:  (B,) int32 (used only when training=True)
    """
    B, D = x.shape
    C, D2 = weight.shape
    assert D == D2

    # Lane-dense padding: D and C to multiples of 128; C further padded to a
    # multiple of the class tile so the grid divides evenly.  Zero padding
    # changes neither norms nor dot products; padded classes are sliced off.
    D_pad = _round_up(D, 128)
    TC = min(c_tile, _round_up(C, 128))
    C_pad = _round_up(C, TC)

    if D_pad != D:
        x = jnp.pad(x, ((0, 0), (0, D_pad - D)))
        weight = jnp.pad(weight, ((0, 0), (0, D_pad - D)))
    if C_pad != C:
        weight = jnp.pad(weight, ((0, C_pad - C), (0, 0)))

    if label is None:
        label = jnp.zeros((B,), jnp.int32)
    label2d = label.reshape(B, 1).astype(jnp.int32)
    # TODO(synk): labels could live in SMEM via scalar prefetch; kept as a tiny
    # (B, 1) VMEM block for lowering robustness of the vectorized compare.

    kernel = functools.partial(
        _arc_margin_kernel,
        training=bool(training),
        s=float(s),
        cos_m=math.cos(m),
        sin_m=math.sin(m),
        th=math.cos(math.pi - m),
        mm=math.sin(math.pi - m) * m,
        easy_margin=bool(easy_margin),
        c_tile=TC,
    )

    cost = pl.CostEstimate(
        flops=(2 * B * C_pad * D_pad            # matmul
               + 3 * (B + C_pad) * D_pad        # normalization
               + 8 * B * C_pad),                # margin epilogue
        transcendentals=B + C_pad + B * C_pad,  # rsqrt per row + sqrt per elem
        bytes_accessed=4 * (B * D_pad + C_pad * D_pad + B * C_pad + B),
    )

    out = pl.pallas_call(
        kernel,
        out_shape=jax.ShapeDtypeStruct((B, C_pad), jnp.float32),
        grid=(C_pad // TC,),
        in_specs=[
            pl.BlockSpec((B, 1), lambda j: (0, 0)),        # label (int32)
            pl.BlockSpec((B, D_pad), lambda j: (0, 0)),    # x (resident)
            pl.BlockSpec((TC, D_pad), lambda j: (j, 0)),   # weight tile (streamed)
        ],
        out_specs=pl.BlockSpec((B, TC), lambda j: (0, j)),
        compiler_params=pltpu.CompilerParams(
            dimension_semantics=("parallel",),     # shard C tiles across TCs (v7x)
            vmem_limit_bytes=48 * 1024 * 1024,     # safe under v7x's 64 MiB VMEM
        ),
        cost_estimate=cost,
    )(label2d, x, weight)

    return out[:, :C]


def _init_weight(key, out_feature, in_feature):
    # nn.init.xavier_uniform_ : U(-a, a), a = sqrt(6 / (fan_in + fan_out))
    bound = math.sqrt(6.0 / (in_feature + out_feature))
    return jax.random.uniform(key, (out_feature, in_feature),
                              dtype=jnp.float32, minval=-bound, maxval=bound)


if __name__ == "__main__":
    # Module defaults: in_feature=1000, out_feature=18 (small enough already).
    B, in_feature, out_feature = 8, 1000, 18
    s_scale, margin = 64.0, 0.2

    key = jax.random.PRNGKey(0)
    kx, kw, kl = jax.random.split(key, 3)
    x = jax.random.normal(kx, (B, in_feature), dtype=jnp.float32)
    weight = _init_weight(kw, out_feature, in_feature)
    label = jax.random.randint(kl, (B,), 0, out_feature, dtype=jnp.int32)

    out_train = arc_margin_product(x, weight, label, training=True,
                                   s=s_scale, m=margin, easy_margin=False)
    out_eval = arc_margin_product(x, weight, None, training=False,
                                  s=s_scale, m=margin, easy_margin=False)
    jax.block_until_ready(out_train)
    jax.block_until_ready(out_eval)

    # Pure-JAX reference matching the kernel's numerics (rsqrt normalization,
    # bf16 MXU operands, f32 accumulation).
    inv_x = lax.rsqrt(jnp.maximum(jnp.sum(x * x, -1, keepdims=True), 1e-24))
    inv_w = lax.rsqrt(jnp.maximum(jnp.sum(weight * weight, -1, keepdims=True), 1e-24))
    xn = (x * inv_x).astype(jnp.bfloat16)
    wn = (weight * inv_w).astype(jnp.bfloat16)
    cosine = jnp.dot(xn, wn.T, preferred_element_type=jnp.float32)
    sine = jnp.sqrt(jnp.maximum(1.0 - cosine * cosine, 0.0))
    phi = cosine * math.cos(margin) - sine * math.sin(margin)
    th = math.cos(math.pi - margin)
    mm = math.sin(math.pi - margin) * margin
    phi = jnp.where(cosine > th, phi, cosine - mm)
    one_hot = jax.nn.one_hot(label, out_feature, dtype=jnp.float32)
    ref_train = (one_hot * phi + (1.0 - one_hot) * cosine) * s_scale
    ref_eval = cosine * s_scale

    assert out_train.shape == (B, out_feature)
    assert out_eval.shape == (B, out_feature)
    assert jnp.allclose(out_train, ref_train, atol=2e-2, rtol=1e-3)
    assert jnp.allclose(out_eval, ref_eval, atol=2e-2, rtol=1e-3)
    print("KERNEL_OK")
</pallas_src>

<mosaic_0001>
module attributes {stable_mosaic.version = 11 : i64} {
  func.func @_arc_margin_kernel(%arg0: i32, %arg1: memref<8x1xi32, #tpu.memory_space<vmem>>, %arg2: memref<8x1024xf32, #tpu.memory_space<vmem>>, %arg3: memref<128x1024xf32, #tpu.memory_space<vmem>>, %arg4: memref<8x128xf32, #tpu.memory_space<vmem>>) attributes {dimension_semantics = [#tpu.dimension_semantics<parallel>], iteration_bounds = array<i64: 1>, scalar_prefetch = 0 : i64, scratch_operands = 0 : i64, tpu.core_type = #tpu.core_type<tc>, window_params = [{pipeline_mode = #tpu.pipeline_mode<synchronous>, transform_indices = @transform_0, window_bounds = array<i64: 8, 1>}, {pipeline_mode = #tpu.pipeline_mode<synchronous>, transform_indices = @transform_1, window_bounds = array<i64: 8, 1024>}, {transform_indices = @transform_2, window_bounds = array<i64: 128, 1024>}, {transform_indices = @transform_3, window_bounds = array<i64: 8, 128>}]} {
    %c0 = arith.constant 0 : index
    %c0_0 = arith.constant 0 : index
    %0 = vector.load %arg2[%c0, %c0_0] : memref<8x1024xf32, #tpu.memory_space<vmem>>, vector<8x1024xf32>
    %1 = arith.mulf %0, %0 : vector<8x1024xf32>
    %cst = arith.constant dense<0.000000e+00> : vector<8xf32>
    %2 = vector.multi_reduction <add>, %1, %cst [1] : vector<8x1024xf32> to vector<8xf32>
    %3 = vector.shape_cast %2 : vector<8xf32> to vector<8x1xf32>
    %cst_1 = arith.constant 1.000000e-24 : f32
    %4 = vector.broadcast %cst_1 : f32 to vector<8x1xf32>
    %5 = arith.maximumf %3, %4 : vector<8x1xf32>
    %6 = math.rsqrt %5 : vector<8x1xf32>
    %7 = vector.broadcast %6 : vector<8x1xf32> to vector<8x1024xf32>
    %8 = arith.mulf %0, %7 : vector<8x1024xf32>
    %9 = arith.truncf %8 : vector<8x1024xf32> to vector<8x1024xbf16>
    %c0_2 = arith.constant 0 : index
    %c0_3 = arith.constant 0 : index
    %10 = vector.load %arg3[%c0_2, %c0_3] : memref<128x1024xf32, #tpu.memory_space<vmem>>, vector<128x1024xf32>
    %11 = arith.mulf %10, %10 : vector<128x1024xf32>
    %cst_4 = arith.constant dense<0.000000e+00> : vector<128xf32>
    %12 = vector.multi_reduction <add>, %11, %cst_4 [1] : vector<128x1024xf32> to vector<128xf32>
    %13 = vector.shape_cast %12 : vector<128xf32> to vector<128x1xf32>
    %cst_5 = arith.constant 1.000000e-24 : f32
    %14 = vector.broadcast %cst_5 : f32 to vector<128x1xf32>
    %15 = arith.maximumf %13, %14 : vector<128x1xf32>
    %16 = math.rsqrt %15 : vector<128x1xf32>
    %17 = vector.broadcast %16 : vector<128x1xf32> to vector<128x1024xf32>
    %18 = arith.mulf %10, %17 : vector<128x1024xf32>
    %19 = arith.truncf %18 : vector<128x1024xf32> to vector<128x1024xbf16>
    %cst_6 = arith.constant dense<0.000000e+00> : vector<8x128xf32>
    %20 = tpu.matmul %9, %19, %cst_6 {dimension_numbers = #tpu.dot_dimension_numbers<[1], [1], [0], [0], [0, 0, 1, 0], [], []>} : vector<8x1024xbf16>, vector<128x1024xbf16>, vector<8x128xf32> -> vector<8x128xf32>
    %21 = arith.mulf %20, %20 : vector<8x128xf32>
    %cst_7 = arith.constant 1.000000e+00 : f32
    %22 = vector.broadcast %cst_7 : f32 to vector<8x128xf32>
    %23 = arith.subf %22, %21 : vector<8x128xf32>
    %cst_8 = arith.constant 0.000000e+00 : f32
    %24 = vector.broadcast %cst_8 : f32 to vector<8x128xf32>
    %25 = arith.maximumf %23, %24 : vector<8x128xf32>
    %26 = math.sqrt %25 : vector<8x128xf32>
    %cst_9 = arith.constant 0.980066597 : f32
    %27 = vector.broadcast %cst_9 : f32 to vector<8x128xf32>
    %28 = arith.mulf %20, %27 : vector<8x128xf32>
    %cst_10 = arith.constant 0.198669329 : f32
    %29 = vector.broadcast %cst_10 : f32 to vector<8x128xf32>
    %30 = arith.mulf %26, %29 : vector<8x128xf32>
    %31 = arith.subf %28, %30 : vector<8x128xf32>
    %cst_11 = arith.constant -0.980066597 : f32
    %32 = vector.broadcast %cst_11 : f32 to vector<8x128xf32>
    %33 = arith.cmpf ogt, %20, %32 : vector<8x128xf32>
    %cst_12 = arith.constant 0.0397338644 : f32
    %34 = vector.broadcast %cst_12 : f32 to vector<8x128xf32>
    %35 = arith.subf %20, %34 : vector<8x128xf32>
    %36 = arith.select %33, %31, %35 : vector<8x128xi1>, vector<8x128xf32>
    %37 = tpu.iota {dimensions = array<i32: 1>} : vector<8x128xi32>
    %c128_i32 = arith.constant 128 : i32
    %38 = arith.muli %arg0, %c128_i32 : i32
    %39 = vector.broadcast %38 : i32 to vector<8x128xi32>
    %40 = arith.addi %37, %39 : vector<8x128xi32>
    %c0_13 = arith.constant 0 : index
    %c0_14 = arith.constant 0 : index
    %41 = vector.load %arg1[%c0_13, %c0_14] : memref<8x1xi32, #tpu.memory_space<vmem>>, vector<8x1xi32>
    %42 = vector.broadcast %41 : vector<8x1xi32> to vector<8x128xi32>
    %43 = arith.cmpi eq, %40, %42 : vector<8x128xi32>
    %44 = arith.select %43, %36, %20 : vector<8x128xi1>, vector<8x128xf32>
    %cst_15 = arith.constant 6.400000e+01 : f32
    %45 = vector.broadcast %cst_15 : f32 to vector<8x128xf32>
    %46 = arith.mulf %44, %45 : vector<8x128xf32>
    %c0_16 = arith.constant 0 : index
    %c0_17 = arith.constant 0 : index
    %47 = vector.load %arg4[%c0_16, %c0_17] : memref<8x128xf32, #tpu.memory_space<vmem>>, vector<8x128xf32>
    tpu.vector_store %arg4[%c0_16, %c0_17], %46 {strides = array<i32>} : memref<8x128xf32, #tpu.memory_space<vmem>>, vector<8x128xf32>,
    return
  }
  func.func @transform_0(%arg0: i32) -> (i32, i32) {
    %c0_i32 = arith.constant 0 : i32
    %c0_i32_0 = arith.constant 0 : i32
    %c0_i32_1 = arith.constant 0 : i32
    return %c0_i32, %c0_i32_0 : i32, i32
  }
  func.func @transform_1(%arg0: i32) -> (i32, i32) {
    %c0_i32 = arith.constant 0 : i32
    %c0_i32_0 = arith.constant 0 : i32
    %c0_i32_1 = arith.constant 0 : i32
    return %c0_i32, %c0_i32_0 : i32, i32
  }
  func.func @transform_2(%arg0: i32) -> (i32, i32) {
    %c0_i32 = arith.constant 0 : i32
    %c0_i32_0 = arith.constant 0 : i32
    return %arg0, %c0_i32 : i32, i32
  }
  func.func @transform_3(%arg0: i32) -> (i32, i32) {
    %c0_i32 = arith.constant 0 : i32
    %c0_i32_0 = arith.constant 0 : i32
    return %c0_i32, %arg0 : i32, i32
  }
}

</mosaic_0001>

<llo_original>
// kernel: tpu_custom_call.1
$region0: #{tpu_custom_call.1}
  #allocation0 [shape = 'u32[]', space=smem, size = 0x4, offset = 0x4, fixed_abs, tag = 'smem constant byte address 0x4 - core index']
  #allocation1 [shape = 'u32[144,128]{1,0:T(1,128)}', space=vmem, size = 0x12000, scoped, tag = 'internal scratch']
  %s0 = inlined_call_operand.vmem [shape: s32[8,1], index: 0, kind: input, shape index: {}]
  %s1 = inlined_call_operand.hbm [shape: f32[8,1024], index: 1, kind: input, shape index: {}]
  %s2 = inlined_call_operand.hbm [shape: f32[128,1024], index: 2, kind: input, shape index: {}]
  %s3 = inlined_call_operand.hbm [shape: f32[8,128], index: 3, kind: output, shape index: {}]
  %s4 = sld [smem:[#allocation0]]
  $region30: #{tpu_custom_call.1} parent=0
    _
  %s6 = ssub.s32 1, %s4
  %s7 = scalar_select 0, %s6, %s4
  $region1: #{tpu_custom_call.1} parent=0
    #allocation2 [shape = 'u8[32768]{0}', space=vmem, size = 0x8000, scoped, tag = 'input window, operand 1, single buffered']
    #allocation3 [shape = 's32[1]{0}', space=sflag, size = 0x4, scoped, tag = 'scoped memory for tpu_custom_call.1']
    #allocation4 [shape = 's32[1]{0}', space=sflag, size = 0x4, scoped, tag = 'scoped memory for tpu_custom_call.1']
    #allocation5 [shape = 'u8[524288]{0}', space=vmem, size = 0x80000, scoped, tag = 'input window, operand 2, single buffered']
    #allocation6 [shape = 's32[1]{0}', space=sflag, size = 0x4, scoped, tag = 'scoped memory for tpu_custom_call.1']
    #allocation7 [shape = 'u8[4096]{0}', space=vmem, size = 0x1000, scoped, tag = 'output window, operand 0, single buffered']
    %8 = vsyncpa [#allocation3], 0
    %9 = vsyncpa [#allocation6], 0
    %10 = vsyncpa [#allocation4], 0
    // Predicated region
    $region2: #{tpu_custom_call.1} parent=1 // pred_check
      _
    $region3: #{tpu_custom_call.1} parent=1 // pred_check_branch
      %12 = sbr.rel (0) target = $region5
    $region4: #{tpu_custom_call.1} parent=1 // pred_region
      _
    $region5: #{tpu_custom_call.1} parent=1 // pred_fallthru
      _
    // Predicated region
    $region6: #{tpu_custom_call.1} parent=1 // pred_check
      _
    $region7: #{tpu_custom_call.1} parent=1 // pred_check_branch
      %14 = sbr.rel (0) target = $region9
    $region8: #{tpu_custom_call.1} parent=1 // pred_region
      %s16 = ssub.s32 1024, 1024
      %17 = vsyncadd [#allocation3], %s16
      %s19 = sshll.u32 [#allocation2], 4
      %s20 = int_to_ptr.vmem [resolvable:$true] %s19
      %22 = dma.hbm_to_vmem [thread:$0]  %s1, 1024, %s20, [#allocation3]
    $region9: #{tpu_custom_call.1} parent=1 // pred_fallthru
      _
    // Predicated region
    $region10: #{tpu_custom_call.1} parent=1 // pred_check
      _
    $region11: #{tpu_custom_call.1} parent=1 // pred_check_branch
      %24 = sbr.rel (0) target = $region13
    $region12: #{tpu_custom_call.1} parent=1 // pred_region
      %s26 = ssub.s32 16384, 16384
      %27 = vsyncadd [#allocation6], %s26
      %s28 = sshll.u32 [#allocation5], 4
      %s29 = int_to_ptr.vmem [resolvable:$true] %s28
      %34 = dma.hbm_to_vmem [thread:$0]  %s2, 16384, %s29, [#allocation6], 1024, 1024, 64
    $region13: #{tpu_custom_call.1} parent=1 // pred_fallthru
      _
    // Predicated region
    $region14: #{tpu_custom_call.1} parent=1 // pred_check
      _
    $region15: #{tpu_custom_call.1} parent=1 // pred_check_branch
      %36 = sbr.rel (0) target = $region17
    $region16: #{tpu_custom_call.1} parent=1 // pred_region
      %37 = dma.done [#allocation3], 1024
    $region17: #{tpu_custom_call.1} parent=1 // pred_fallthru
      _
    // Predicated region
    $region18: #{tpu_custom_call.1} parent=1 // pred_check
      _
    $region19: #{tpu_custom_call.1} parent=1 // pred_check_branch
      %39 = sbr.rel (0) target = $region21
    $region20: #{tpu_custom_call.1} parent=1 // pred_region
      %40 = dma.done [#allocation6], 16384
    $region21: #{tpu_custom_call.1} parent=1 // pred_fallthru
      _
    %v42 = vld [vmem:[#allocation2] sm:$0xff]
    %v43 = vld [vmem:[#allocation2 + $0x8] sm:$0xff]
    %v44 = vld [vmem:[#allocation2 + $0x10] sm:$0xff]
    %v45 = vld [vmem:[#allocation2 + $0x18] sm:$0xff]
    %v46 = vld [vmem:[#allocation2 + $0x20] sm:$0xff]
    %v47 = vld [vmem:[#allocation2 + $0x28] sm:$0xff]
    %v48 = vld [vmem:[#allocation2 + $0x30] sm:$0xff]
    %v49 = vld [vmem:[#allocation2 + $0x38] sm:$0xff]
    %v50 = vmul.f32 %v42, %v42
    %v51 = vmul.f32 %v43, %v43
    %v52 = vmul.f32 %v44, %v44
    %v53 = vmul.f32 %v45, %v45
    %v54 = vmul.f32 %v46, %v46
    %v55 = vmul.f32 %v47, %v47
    %v56 = vmul.f32 %v48, %v48
    %v57 = vmul.f32 %v49, %v49
    %v58 = vadd.f32 %v50, %v51
    %v59 = vadd.f32 %v58, %v52
    %v60 = vadd.f32 %v59, %v53
    %v61 = vadd.f32 %v60, %v54
    %v62 = vadd.f32 %v61, %v55
    %v63 = vadd.f32 %v62, %v56
    %v64 = vadd.f32 %v63, %v57
    %65 = vadd.xlane.f32.xlu0 %v64
    %v66 = vpop.xlane.xlu0 %65
    %v67 = vmax.f32 %v66, 1e-24
    %v68 = vrsqrt.pop %v67
    %v69 = vmul.f32 %v42, %v68
    %v70 = vmul.f32 %v43, %v68
    %v71 = vmul.f32 %v44, %v68
    %v72 = vmul.f32 %v45, %v68
    %v73 = vmul.f32 %v46, %v68
    %v74 = vmul.f32 %v47, %v68
    %v75 = vmul.f32 %v48, %v68
    %v76 = vmul.f32 %v49, %v68
    %v77 = vpack.c.bf16 %v69, %v69
    %v78 = vpack.c.bf16 %v70, %v70
    %v79 = vpack.c.bf16 %v71, %v71
    %v80 = vpack.c.bf16 %v72, %v72
    %v81 = vpack.c.bf16 %v73, %v73
    %v82 = vpack.c.bf16 %v74, %v74
    %v83 = vpack.c.bf16 %v75, %v75
    %v84 = vpack.c.bf16 %v76, %v76
    %v85 = vld [vmem:[#allocation5] sm:$0xff]
    %v86 = vld [vmem:[#allocation5 + $0x8] sm:$0xff]
    %v87 = vld [vmem:[#allocation5 + $0x10] sm:$0xff]
    %v88 = vld [vmem:[#allocation5 + $0x18] sm:$0xff]
    %v89 = vld [vmem:[#allocation5 + $0x20] sm:$0xff]
    %v90 = vld [vmem:[#allocation5 + $0x28] sm:$0xff]
    %v91 = vld [vmem:[#allocation5 + $0x30] sm:$0xff]
    %v92 = vld [vmem:[#allocation5 + $0x38] sm:$0xff]
    %v93 = vld [vmem:[#allocation5 + $0x40] sm:$0xff]
    %v94 = vld [vmem:[#allocation5 + $0x48] sm:$0xff]
    %v95 = vld [vmem:[#allocation5 + $0x50] sm:$0xff]
    %v96 = vld [vmem:[#allocation5 + $0x58] sm:$0xff]
    %v97 = vld [vmem:[#allocation5 + $0x60] sm:$0xff]
    %v98 = vld [vmem:[#allocation5 + $0x68] sm:$0xff]
    %v99 = vld [vmem:[#allocation5 + $0x70] sm:$0xff]
    %v100 = vld [vmem:[#allocation5 + $0x78] sm:$0xff]
    %v101 = vld [vmem:[#allocation5 + $0x80] sm:$0xff]
    %v102 = vld [vmem:[#allocation5 + $0x88] sm:$0xff]
    %v103 = vld [vmem:[#allocation5 + $0x90] sm:$0xff]
    %v104 = vld [vmem:[#allocation5 + $0x98] sm:$0xff]
    %v105 = vld [vmem:[#allocation5 + $0xa0] sm:$0xff]
    %v106 = vld [vmem:[#allocation5 + $0xa8] sm:$0xff]
    %v107 = vld [vmem:[#allocation5 + $0xb0] sm:$0xff]
    %v108 = vld [vmem:[#allocation5 + $0xb8] sm:$0xff]
    %v109 = vld [vmem:[#allocation5 + $0xc0] sm:$0xff]
    %v110 = vld [vmem:[#allocation5 + $0xc8] sm:$0xff]
    %v111 = vld [vmem:[#allocation5 + $0xd0] sm:$0xff]
    %v112 = vld [vmem:[#allocation5 + $0xd8] sm:$0xff]
    %v113 = vld [vmem:[#allocation5 + $0xe0] sm:$0xff]
    %v114 = vld [vmem:[#allocation5 + $0xe8] sm:$0xff]
    %v115 = vld [vmem:[#allocation5 + $0xf0] sm:$0xff]
    %v116 = vld [vmem:[#allocation5 + $0xf8] sm:$0xff]
    %v117 = vld [vmem:[#allocation5 + $0x100] sm:$0xff]
    %v118 = vld [vmem:[#allocation5 + $0x108] sm:$0xff]
    %v119 = vld [vmem:[#allocation5 + $0x110] sm:$0xff]
    %v120 = vld [vmem:[#allocation5 + $0x118] sm:$0xff]
    %v121 = vld [vmem:[#allocation5 + $0x120] sm:$0xff]
    %v122 = vld [vmem:[#allocation5 + $0x128] sm:$0xff]
    %v123 = vld [vmem:[#allocation5 + $0x130] sm:$0xff]
    %v124 = vld [vmem:[#allocation5 + $0x138] sm:$0xff]
    %v125 = vld [vmem:[#allocation5 + $0x140] sm:$0xff]
    %v126 = vld [vmem:[#allocation5 + $0x148] sm:$0xff]
    %v127 = vld [vmem:[#allocation5 + $0x150] sm:$0xff]
    %v128 = vld [vmem:[#allocation5 + $0x158] sm:$0xff]
    %v129 = vld [vmem:[#allocation5 + $0x160] sm:$0xff]
    %v130 = vld [vmem:[#allocation5 + $0x168] sm:$0xff]
    %v131 = vld [vmem:[#allocation5 + $0x170] sm:$0xff]
    %v132 = vld [vmem:[#allocation5 + $0x178] sm:$0xff]
    %v133 = vld [vmem:[#allocation5 + $0x180] sm:$0xff]
    %v134 = vld [vmem:[#allocation5 + $0x188] sm:$0xff]
    %v135 = vld [vmem:[#allocation5 + $0x190] sm:$0xff]
    %v136 = vld [vmem:[#allocation5 + $0x198] sm:$0xff]
    %v137 = vld [vmem:[#allocation5 + $0x1a0] sm:$0xff]
    %v138 = vld [vmem:[#allocation5 + $0x1a8] sm:$0xff]
    %v139 = vld [vmem:[#allocation5 + $0x1b0] sm:$0xff]
    %v140 = vld [vmem:[#allocation5 + $0x1b8] sm:$0xff]
    %v141 = vld [vmem:[#allocation5 + $0x1c0] sm:$0xff]
    %v142 = vld [vmem:[#allocation5 + $0x1c8] sm:$0xff]
    %v143 = vld [vmem:[#allocation5 + $0x1d0] sm:$0xff]
    %v144 = vld [vmem:[#allocation5 + $0x1d8] sm:$0xff]
    %v145 = vld [vmem:[#allocation5 + $0x1e0] sm:$0xff]
    %v146 = vld [vmem:[#allocation5 + $0x1e8] sm:$0xff]
    %v147 = vld [vmem:[#allocation5 + $0x1f0] sm:$0xff]
    %v148 = vld [vmem:[#allocation5 + $0x1f8] sm:$0xff]
    %v149 = vld [vmem:[#allocation5 + $0x200] sm:$0xff]
    %v150 = vld [vmem:[#allocation5 + $0x208] sm:$0xff]
    %v151 = vld [vmem:[#allocation5 + $0x210] sm:$0xff]
    %v152 = vld [vmem:[#allocation5 + $0x218] sm:$0xff]
    %v153 = vld [vmem:[#allocation5 + $0x220] sm:$0xff]
    %v154 = vld [vmem:[#allocation5 + $0x228] sm:$0xff]
    %v155 = vld [vmem:[#allocation5 + $0x230] sm:$0xff]
    %v156 = vld [vmem:[#allocation5 + $0x238] sm:$0xff]
    %v157 = vld [vmem:[#allocation5 + $0x240] sm:$0xff]
    %v158 = vld [vmem:[#allocation5 + $0x248] sm:$0xff]
    %v159 = vld [vmem:[#allocation5 + $0x250] sm:$0xff]
    %v160 = vld [vmem:[#allocation5 + $0x258] sm:$0xff]
    %v161 = vld [vmem:[#allocation5 + $0x260] sm:$0xff]
    %v162 = vld [vmem:[#allocation5 + $0x268] sm:$0xff]
    %v163 = vld [vmem:[#allocation5 + $0x270] sm:$0xff]
    %v164 = vld [vmem:[#allocation5 + $0x278] sm:$0xff]
    %v165 = vld [vmem:[#allocation5 + $0x280] sm:$0xff]
    %v166 = vld [vmem:[#allocation5 + $0x288] sm:$0xff]
    %v167 = vld [vmem:[#allocation5 + $0x290] sm:$0xff]
    %v168 = vld [vmem:[#allocation5 + $0x298] sm:$0xff]
    %v169 = vld [vmem:[#allocation5 + $0x2a0] sm:$0xff]
    %v170 = vld [vmem:[#allocation5 + $0x2a8] sm:$0xff]
    %v171 = vld [vmem:[#allocation5 + $0x2b0] sm:$0xff]
    %v172 = vld [vmem:[#allocation5 + $0x2b8] sm:$0xff]
    %v173 = vld [vmem:[#allocation5 + $0x2c0] sm:$0xff]
    %v174 = vld [vmem:[#allocation5 + $0x2c8] sm:$0xff]
    %v175 = vld [vmem:[#allocation5 + $0x2d0] sm:$0xff]
    %v176 = vld [vmem:[#allocation5 + $0x2d8] sm:$0xff]
    %v177 = vld [vmem:[#allocation5 + $0x2e0] sm:$0xff]
    %v178 = vld [vmem:[#allocation5 + $0x2e8] sm:$0xff]
    %v179 = vld [vmem:[#allocation5 + $0x2f0] sm:$0xff]
    %v180 = vld [vmem:[#allocation5 + $0x2f8] sm:$0xff]
    %v181 = vld [vmem:[#allocation5 + $0x300] sm:$0xff]
    %v182 = vld [vmem:[#allocation5 + $0x308] sm:$0xff]
    %v183 = vld [vmem:[#allocation5 + $0x310] sm:$0xff]
    %v184 = vld [vmem:[#allocation5 + $0x318] sm:$0xff]
    %v185 = vld [vmem:[#allocation5 + $0x320] sm:$0xff]
    %v186 = vld [vmem:[#allocation5 + $0x328] sm:$0xff]
    %v187 = vld [vmem:[#allocation5 + $0x330] sm:$0xff]
    %v188 = vld [vmem:[#allocation5 + $0x338] sm:$0xff]
    %v189 = vld [vmem:[#allocation5 + $0x340] sm:$0xff]
    %v190 = vld [vmem:[#allocation5 + $0x348] sm:$0xff]
    %v191 = vld [vmem:[#allocation5 + $0x350] sm:$0xff]
    %v192 = vld [vmem:[#allocation5 + $0x358] sm:$0xff]
    %v193 = vld [vmem:[#allocation5 + $0x360] sm:$0xff]
    %v194 = vld [vmem:[#allocation5 + $0x368] sm:$0xff]
    %v195 = vld [vmem:[#allocation5 + $0x370] sm:$0xff]
    %v196 = vld [vmem:[#allocation5 + $0x378] sm:$0xff]
    %v197 = vld [vmem:[#allocation5 + $0x380] sm:$0xff]
    %v198 = vld [vmem:[#allocation5 + $0x388] sm:$0xff]
    %v199 = vld [vmem:[#allocation5 + $0x390] sm:$0xff]
    %v200 = vld [vmem:[#allocation5 + $0x398] sm:$0xff]
    %v201 = vld [vmem:[#allocation5 + $0x3a0] sm:$0xff]
    %v202 = vld [vmem:[#allocation5 + $0x3a8] sm:$0xff]
    %v203 = vld [vmem:[#allocation5 + $0x3b0] sm:$0xff]
    %v204 = vld [vmem:[#allocation5 + $0x3b8] sm:$0xff]
    %v205 = vld [vmem:[#allocation5 + $0x3c0] sm:$0xff]
    %v206 = vld [vmem:[#allocation5 + $0x3c8] sm:$0xff]
    %v207 = vld [vmem:[#allocation5 + $0x3d0] sm:$0xff]
    %v208 = vld [vmem:[#allocation5 + $0x3d8] sm:$0xff]
    %v209 = vld [vmem:[#allocation5 + $0x3e0] sm:$0xff]
    %v210 = vld [vmem:[#allocation5 + $0x3e8] sm:$0xff]
    %v211 = vld [vmem:[#allocation5 + $0x3f0] sm:$0xff]
    %v212 = vld [vmem:[#allocation5 + $0x3f8] sm:$0xff]
    %v213 = vmul.f32 %v85, %v85
    %v214 = vmul.f32 %v86, %v86
    %v215 = vmul.f32 %v87, %v87
    %v216 = vmul.f32 %v88, %v88
    %v217 = vmul.f32 %v89, %v89
    %v218 = vmul.f32 %v90, %v90
    %v219 = vmul.f32 %v91, %v91
    %v220 = vmul.f32 %v92, %v92
    %v221 = vmul.f32 %v93, %v93
    %v222 = vmul.f32 %v94, %v94
    %v223 = vmul.f32 %v95, %v95
    %v224 = vmul.f32 %v96, %v96
    %v225 = vmul.f32 %v97, %v97
    %v226 = vmul.f32 %v98, %v98
    %v227 = vmul.f32 %v99, %v99
    %v228 = vmul.f32 %v100, %v100
    %v229 = vmul.f32 %v101, %v101
    %v230 = vmul.f32 %v102, %v102
    %v231 = vmul.f32 %v103, %v103
    %v232 = vmul.f32 %v104, %v104
    %v233 = vmul.f32 %v105, %v105
    %v234 = vmul.f32 %v106, %v106
    %v235 = vmul.f32 %v107, %v107
    %v236 = vmul.f32 %v108, %v108
    %v237 = vmul.f32 %v109, %v109
    %v238 = vmul.f32 %v110, %v110
    %v239 = vmul.f32 %v111, %v111
    %v240 = vmul.f32 %v112, %v112
    %v241 = vmul.f32 %v113, %v113
    %v242 = vmul.f32 %v114, %v114
    %v243 = vmul.f32 %v115, %v115
    %v244 = vmul.f32 %v116, %v116
    %v245 = vmul.f32 %v117, %v117
    %v246 = vmul.f32 %v118, %v118
    %v247 = vmul.f32 %v119, %v119
    %v248 = vmul.f32 %v120, %v120
    %v249 = vmul.f32 %v121, %v121
    %v250 = vmul.f32 %v122, %v122
    %v251 = vmul.f32 %v123, %v123
    %v252 = vmul.f32 %v124, %v124
    %v253 = vmul.f32 %v125, %v125
    %v254 = vmul.f32 %v126, %v126
    %v255 = vmul.f32 %v127, %v127
    %v256 = vmul.f32 %v128, %v128
    %v257 = vmul.f32 %v129, %v129
    %v258 = vmul.f32 %v130, %v130
    %v259 = vmul.f32 %v131, %v131
    %v260 = vmul.f32 %v132, %v132
    %v261 = vmul.f32 %v133, %v133
    %v262 = vmul.f32 %v134, %v134
    %v263 = vmul.f32 %v135, %v135
    %v264 = vmul.f32 %v136, %v136
    %v265 = vmul.f32 %v137, %v137
    %v266 = vmul.f32 %v138, %v138
    %v267 = vmul.f32 %v139, %v139
    %v268 = vmul.f32 %v140, %v140
    %v269 = vmul.f32 %v141, %v141
    %v270 = vmul.f32 %v142, %v142
    %v271 = vmul.f32 %v143, %v143
    %v272 = vmul.f32 %v144, %v144
    %v273 = vmul.f32 %v145, %v145
    %v274 = vmul.f32 %v146, %v146
    %v275 = vmul.f32 %v147, %v147
    %v276 = vmul.f32 %v148, %v148
    %v277 = vmul.f32 %v149, %v149
    %v278 = vmul.f32 %v150, %v150
    %v279 = vmul.f32 %v151, %v151
    %v280 = vmul.f32 %v152, %v152
    %v281 = vmul.f32 %v153, %v153
    %v282 = vmul.f32 %v154, %v154
    %v283 = vmul.f32 %v155, %v155
    %v284 = vmul.f32 %v156, %v156
    %v285 = vmul.f32 %v157, %v157
    %v286 = vmul.f32 %v158, %v158
    %v287 = vmul.f32 %v159, %v159
    %v288 = vmul.f32 %v160, %v160
    %v289 = vmul.f32 %v161, %v161
    %v290 = vmul.f32 %v162, %v162
    %v291 = vmul.f32 %v163, %v163
    %v292 = vmul.f32 %v164, %v164
    %v293 = vmul.f32 %v165, %v165
    %v294 = vmul.f32 %v166, %v166
    %v295 = vmul.f32 %v167, %v167
    %v296 = vmul.f32 %v168, %v168
    %v297 = vmul.f32 %v169, %v169
    %v298 = vmul.f32 %v170, %v170
    %v299 = vmul.f32 %v171, %v171
    %v300 = vmul.f32 %v172, %v172
    %v301 = vmul.f32 %v173, %v173
    %v302 = vmul.f32 %v174, %v174
    %v303 = vmul.f32 %v175, %v175
    %v304 = vmul.f32 %v176, %v176
    %v305 = vmul.f32 %v177, %v177
    %v306 = vmul.f32 %v178, %v178
    %v307 = vmul.f32 %v179, %v179
    %v308 = vmul.f32 %v180, %v180
    %v309 = vmul.f32 %v181, %v181
    %v310 = vmul.f32 %v182, %v182
    %v311 = vmul.f32 %v183, %v183
    %v312 = vmul.f32 %v184, %v184
    %v313 = vmul.f32 %v185, %v185
    %v314 = vmul.f32 %v186, %v186
    %v315 = vmul.f32 %v187, %v187
    %v316 = vmul.f32 %v188, %v188
    %v317 = vmul.f32 %v189, %v189
    %v318 = vmul.f32 %v190, %v190
    %v319 = vmul.f32 %v191, %v191
    %v320 = vmul.f32 %v192, %v192
    %v321 = vmul.f32 %v193, %v193
    %v322 = vmul.f32 %v194, %v194
    %v323 = vmul.f32 %v195, %v195
    %v324 = vmul.f32 %v196, %v196
    %v325 = vmul.f32 %v197, %v197
    %v326 = vmul.f32 %v198, %v198
    %v327 = vmul.f32 %v199, %v199
    %v328 = vmul.f32 %v200, %v200
    %v329 = vmul.f32 %v201, %v201
    %v330 = vmul.f32 %v202, %v202
    %v331 = vmul.f32 %v203, %v203
    %v332 = vmul.f32 %v204, %v204
    %v333 = vmul.f32 %v205, %v205
    %v334 = vmul.f32 %v206, %v206
    %v335 = vmul.f32 %v207, %v207
    %v336 = vmul.f32 %v208, %v208
    %v337 = vmul.f32 %v209, %v209
    %v338 = vmul.f32 %v210, %v210
    %v339 = vmul.f32 %v211, %v211
    %v340 = vmul.f32 %v212, %v212
    %v341 = vadd.f32 %v213, %v214
    %v342 = vadd.f32 %v341, %v215
    %v343 = vadd.f32 %v342, %v216
    %v344 = vadd.f32 %v343, %v217
    %v345 = vadd.f32 %v344, %v218
    %v346 = vadd.f32 %v345, %v219
    %v347 = vadd.f32 %v346, %v220
    %348 = vadd.xlane.f32.xlu0 %v347
    %v349 = vpop.xlane.xlu0 %348
    %v350 = vadd.f32 %v221, %v222
    %v351 = vadd.f32 %v350, %v223
    %v352 = vadd.f32 %v351, %v224
    %v353 = vadd.f32 %v352, %v225
    %v354 = vadd.f32 %v353, %v226
    %v355 = vadd.f32 %v354, %v227
    %v356 = vadd.f32 %v355, %v228
    %357 = vadd.xlane.f32.xlu0 %v356
    %v358 = vpop.xlane.xlu0 %357
    %v359 = vadd.f32 %v229, %v230
    %v360 = vadd.f32 %v359, %v231
    %v361 = vadd.f32 %v360, %v232
    %v362 = vadd.f32 %v361, %v233
    %v363 = vadd.f32 %v362, %v234
    %v364 = vadd.f32 %v363, %v235
    %v365 = vadd.f32 %v364, %v236
    %366 = vadd.xlane.f32.xlu0 %v365
    %v367 = vpop.xlane.xlu0 %366
    %v368 = vadd.f32 %v237, %v238
    %v369 = vadd.f32 %v368, %v239
    %v370 = vadd.f32 %v369, %v240
    %v371 = vadd.f32 %v370, %v241
    %v372 = vadd.f32 %v371, %v242
    %v373 = vadd.f32 %v372, %v243
    %v374 = vadd.f32 %v373, %v244
    %375 = vadd.xlane.f32.xlu0 %v374
    %v376 = vpop.xlane.xlu0 %375
    %v377 = vadd.f32 %v245, %v246
    %v378 = vadd.f32 %v377, %v247
    %v379 = vadd.f32 %v378, %v248
    %v380 = vadd.f32 %v379, %v249
    %v381 = vadd.f32 %v380, %v250
    %v382 = vadd.f32 %v381, %v251
    %v383 = vadd.f32 %v382, %v252
    %384 = vadd.xlane.f32.xlu0 %v383
    %v385 = vpop.xlane.xlu0 %384
    %v386 = vadd.f32 %v253, %v254
    %v387 = vadd.f32 %v386, %v255
    %v388 = vadd.f32 %v387, %v256
    %v389 = vadd.f32 %v388, %v257
    %v390 = vadd.f32 %v389, %v258
    %v391 = vadd.f32 %v390, %v259
    %v392 = vadd.f32 %v391, %v260
    %393 = vadd.xlane.f32.xlu0 %v392
    %v394 = vpop.xlane.xlu0 %393
    %v395 = vadd.f32 %v261, %v262
    %v396 = vadd.f32 %v395, %v263
    %v397 = vadd.f32 %v396, %v264
    %v398 = vadd.f32 %v397, %v265
    %v399 = vadd.f32 %v398, %v266
    %v400 = vadd.f32 %v399, %v267
    %v401 = vadd.f32 %v400, %v268
    %402 = vadd.xlane.f32.xlu0 %v401
    %v403 = vpop.xlane.xlu0 %402
    %v404 = vadd.f32 %v269, %v270
    %v405 = vadd.f32 %v404, %v271
    %v406 = vadd.f32 %v405, %v272
    %v407 = vadd.f32 %v406, %v273
    %v408 = vadd.f32 %v407, %v274
    %v409 = vadd.f32 %v408, %v275
    %v410 = vadd.f32 %v409, %v276
    %411 = vadd.xlane.f32.xlu0 %v410
    %v412 = vpop.xlane.xlu0 %411
    %v413 = vadd.f32 %v277, %v278
    %v414 = vadd.f32 %v413, %v279
    %v415 = vadd.f32 %v414, %v280
    %v416 = vadd.f32 %v415, %v281
    %v417 = vadd.f32 %v416, %v282
    %v418 = vadd.f32 %v417, %v283
    %v419 = vadd.f32 %v418, %v284
    %420 = vadd.xlane.f32.xlu0 %v419
    %v421 = vpop.xlane.xlu0 %420
    %v422 = vadd.f32 %v285, %v286
    %v423 = vadd.f32 %v422, %v287
    %v424 = vadd.f32 %v423, %v288
    %v425 = vadd.f32 %v424, %v289
    %v426 = vadd.f32 %v425, %v290
    %v427 = vadd.f32 %v426, %v291
    %v428 = vadd.f32 %v427, %v292
    %429 = vadd.xlane.f32.xlu0 %v428
    %v430 = vpop.xlane.xlu0 %429
    %v431 = vadd.f32 %v293, %v294
    %v432 = vadd.f32 %v431, %v295
    %v433 = vadd.f32 %v432, %v296
    %v434 = vadd.f32 %v433, %v297
    %v435 = vadd.f32 %v434, %v298
    %v436 = vadd.f32 %v435, %v299
    %v437 = vadd.f32 %v436, %v300
    %438 = vadd.xlane.f32.xlu0 %v437
    %v439 = vpop.xlane.xlu0 %438
    %v440 = vadd.f32 %v301, %v302
    %v441 = vadd.f32 %v440, %v303
    %v442 = vadd.f32 %v441, %v304
    %v443 = vadd.f32 %v442, %v305
    %v444 = vadd.f32 %v443, %v306
    %v445 = vadd.f32 %v444, %v307
    %v446 = vadd.f32 %v445, %v308
    %447 = vadd.xlane.f32.xlu0 %v446
    %v448 = vpop.xlane.xlu0 %447
    %v449 = vadd.f32 %v309, %v310
    %v450 = vadd.f32 %v449, %v311
    %v451 = vadd.f32 %v450, %v312
    %v452 = vadd.f32 %v451, %v313
    %v453 = vadd.f32 %v452, %v314
    %v454 = vadd.f32 %v453, %v315
    %v455 = vadd.f32 %v454, %v316
    %456 = vadd.xlane.f32.xlu0 %v455
    %v457 = vpop.xlane.xlu0 %456
    %v458 = vadd.f32 %v317, %v318
    %v459 = vadd.f32 %v458, %v319
    %v460 = vadd.f32 %v459, %v320
    %v461 = vadd.f32 %v460, %v321
    %v462 = vadd.f32 %v461, %v322
    %v463 = vadd.f32 %v462, %v323
    %v464 = vadd.f32 %v463, %v324
    %465 = vadd.xlane.f32.xlu0 %v464
    %v466 = vpop.xlane.xlu0 %465
    %v467 = vadd.f32 %v325, %v326
    %v468 = vadd.f32 %v467, %v327
    %v469 = vadd.f32 %v468, %v328
    %v470 = vadd.f32 %v469, %v329
    %v471 = vadd.f32 %v470, %v330
    %v472 = vadd.f32 %v471, %v331
    %v473 = vadd.f32 %v472, %v332
    %474 = vadd.xlane.f32.xlu0 %v473
    %v475 = vpop.xlane.xlu0 %474
    %v476 = vadd.f32 %v333, %v334
    %v477 = vadd.f32 %v476, %v335
    %v478 = vadd.f32 %v477, %v336
    %v479 = vadd.f32 %v478, %v337
    %v480 = vadd.f32 %v479, %v338
    %v481 = vadd.f32 %v480, %v339
    %v482 = vadd.f32 %v481, %v340
    %483 = vadd.xlane.f32.xlu0 %v482
    %v484 = vpop.xlane.xlu0 %483
    %v485 = vmax.f32 %v349, 1e-24
    %v486 = vmax.f32 %v358, 1e-24
    %v487 = vmax.f32 %v367, 1e-24
    %v488 = vmax.f32 %v376, 1e-24
    %v489 = vmax.f32 %v385, 1e-24
    %v490 = vmax.f32 %v394, 1e-24
    %v491 = vmax.f32 %v403, 1e-24
    %v492 = vmax.f32 %v412, 1e-24
    %v493 = vmax.f32 %v421, 1e-24
    %v494 = vmax.f32 %v430, 1e-24
    %v495 = vmax.f32 %v439, 1e-24
    %v496 = vmax.f32 %v448, 1e-24
    %v497 = vmax.f32 %v457, 1e-24
    %v498 = vmax.f32 %v466, 1e-24
    %v499 = vmax.f32 %v475, 1e-24
    %v500 = vmax.f32 %v484, 1e-24
    %v501 = vrsqrt.pop %v485
    %v502 = vrsqrt.pop %v486
    %v503 = vrsqrt.pop %v487
    %v504 = vrsqrt.pop %v488
    %v505 = vrsqrt.pop %v489
    %v506 = vrsqrt.pop %v490
    %v507 = vrsqrt.pop %v491
    %v508 = vrsqrt.pop %v492
    %v509 = vrsqrt.pop %v493
    %v510 = vrsqrt.pop %v494
    %v511 = vrsqrt.pop %v495
    %v512 = vrsqrt.pop %v496
    %v513 = vrsqrt.pop %v497
    %v514 = vrsqrt.pop %v498
    %v515 = vrsqrt.pop %v499
    %v516 = vrsqrt.pop %v500
    %v517 = vmul.f32 %v85, %v501
    %v518 = vmul.f32 %v86, %v501
    %v519 = vmul.f32 %v87, %v501
    %v520 = vmul.f32 %v88, %v501
    %v521 = vmul.f32 %v89, %v501
    %v522 = vmul.f32 %v90, %v501
    %v523 = vmul.f32 %v91, %v501
    %v524 = vmul.f32 %v92, %v501
    %v525 = vmul.f32 %v93, %v502
    %v526 = vmul.f32 %v94, %v502
    %v527 = vmul.f32 %v95, %v502
    %v528 = vmul.f32 %v96, %v502
    %v529 = vmul.f32 %v97, %v502
    %v530 = vmul.f32 %v98, %v502
    %v531 = vmul.f32 %v99, %v502
    %v532 = vmul.f32 %v100, %v502
    %v533 = vmul.f32 %v101, %v503
    %v534 = vmul.f32 %v102, %v503
    %v535 = vmul.f32 %v103, %v503
    %v536 = vmul.f32 %v104, %v503
    %v537 = vmul.f32 %v105, %v503
    %v538 = vmul.f32 %v106, %v503
    %v539 = vmul.f32 %v107, %v503
    %v540 = vmul.f32 %v108, %v503
    %v541 = vmul.f32 %v109, %v504
    %v542 = vmul.f32 %v110, %v504
    %v543 = vmul.f32 %v111, %v504
    %v544 = vmul.f32 %v112, %v504
    %v545 = vmul.f32 %v113, %v504
    %v546 = vmul.f32 %v114, %v504
    %v547 = vmul.f32 %v115, %v504
    %v548 = vmul.f32 %v116, %v504
    %v549 = vmul.f32 %v117, %v505
    %v550 = vmul.f32 %v118, %v505
    %v551 = vmul.f32 %v119, %v505
    %v552 = vmul.f32 %v120, %v505
    %v553 = vmul.f32 %v121, %v505
    %v554 = vmul.f32 %v122, %v505
    %v555 = vmul.f32 %v123, %v505
    %v556 = vmul.f32 %v124, %v505
    %v557 = vmul.f32 %v125, %v506
    %v558 = vmul.f32 %v126, %v506
    %v559 = vmul.f32 %v127, %v506
    %v560 = vmul.f32 %v128, %v506
    %v561 = vmul.f32 %v129, %v506
    %v562 = vmul.f32 %v130, %v506
    %v563 = vmul.f32 %v131, %v506
    %v564 = vmul.f32 %v132, %v506
    %v565 = vmul.f32 %v133, %v507
    %v566 = vmul.f32 %v134, %v507
    %v567 = vmul.f32 %v135, %v507
    %v568 = vmul.f32 %v136, %v507
    %v569 = vmul.f32 %v137, %v507
    %v570 = vmul.f32 %v138, %v507
    %v571 = vmul.f32 %v139, %v507
    %v572 = vmul.f32 %v140, %v507
    %v573 = vmul.f32 %v141, %v508
    %v574 = vmul.f32 %v142, %v508
    %v575 = vmul.f32 %v143, %v508
    %v576 = vmul.f32 %v144, %v508
    %v577 = vmul.f32 %v145, %v508
    %v578 = vmul.f32 %v146, %v508
    %v579 = vmul.f32 %v147, %v508
    %v580 = vmul.f32 %v148, %v508
    %v581 = vmul.f32 %v149, %v509
    %v582 = vmul.f32 %v150, %v509
    %v583 = vmul.f32 %v151, %v509
    %v584 = vmul.f32 %v152, %v509
    %v585 = vmul.f32 %v153, %v509
    %v586 = vmul.f32 %v154, %v509
    %v587 = vmul.f32 %v155, %v509
    %v588 = vmul.f32 %v156, %v509
    %v589 = vmul.f32 %v157, %v510
    %v590 = vmul.f32 %v158, %v510
    %v591 = vmul.f32 %v159, %v510
    %v592 = vmul.f32 %v160, %v510
    %v593 = vmul.f32 %v161, %v510
    %v594 = vmul.f32 %v162, %v510
    %v595 = vmul.f32 %v163, %v510
    %v596 = vmul.f32 %v164, %v510
    %v597 = vmul.f32 %v165, %v511
    %v598 = vmul.f32 %v166, %v511
    %v599 = vmul.f32 %v167, %v511
    %v600 = vmul.f32 %v168, %v511
    %v601 = vmul.f32 %v169, %v511
    %v602 = vmul.f32 %v170, %v511
    %v603 = vmul.f32 %v171, %v511
    %v604 = vmul.f32 %v172, %v511
    %v605 = vmul.f32 %v173, %v512
    %v606 = vmul.f32 %v174, %v512
    %v607 = vmul.f32 %v175, %v512
    %v608 = vmul.f32 %v176, %v512
    %v609 = vmul.f32 %v177, %v512
    %v610 = vmul.f32 %v178, %v512
    %v611 = vmul.f32 %v179, %v512
    %v612 = vmul.f32 %v180, %v512
    %v613 = vmul.f32 %v181, %v513
    %v614 = vmul.f32 %v182, %v513
    %v615 = vmul.f32 %v183, %v513
    %v616 = vmul.f32 %v184, %v513
    %v617 = vmul.f32 %v185, %v513
    %v618 = vmul.f32 %v186, %v513
    %v619 = vmul.f32 %v187, %v513
    %v620 = vmul.f32 %v188, %v513
    %v621 = vmul.f32 %v189, %v514
    %v622 = vmul.f32 %v190, %v514
    %v623 = vmul.f32 %v191, %v514
    %v624 = vmul.f32 %v192, %v514
    %v625 = vmul.f32 %v193, %v514
    %v626 = vmul.f32 %v194, %v514
    %v627 = vmul.f32 %v195, %v514
    %v628 = vmul.f32 %v196, %v514
    %v629 = vmul.f32 %v197, %v515
    %v630 = vmul.f32 %v198, %v515
    %v631 = vmul.f32 %v199, %v515
    %v632 = vmul.f32 %v200, %v515
    %v633 = vmul.f32 %v201, %v515
    %v634 = vmul.f32 %v202, %v515
    %v635 = vmul.f32 %v203, %v515
    %v636 = vmul.f32 %v204, %v515
    %v637 = vmul.f32 %v205, %v516
    %v638 = vmul.f32 %v206, %v516
    %v639 = vmul.f32 %v207, %v516
    %v640 = vmul.f32 %v208, %v516
    %v641 = vmul.f32 %v209, %v516
    %v642 = vmul.f32 %v210, %v516
    %v643 = vmul.f32 %v211, %v516
    %v644 = vmul.f32 %v212, %v516
    %v645 = vpack.c.bf16 %v525, %v517
    %v646 = vpack.c.bf16 %v526, %v518
    %v647 = vpack.c.bf16 %v527, %v519
    %v648 = vpack.c.bf16 %v528, %v520
    %v649 = vpack.c.bf16 %v529, %v521
    %v650 = vpack.c.bf16 %v530, %v522
    %v651 = vpack.c.bf16 %v531, %v523
    %v652 = vpack.c.bf16 %v532, %v524
    %v653 = vpack.c.bf16 %v541, %v533
    %v654 = vpack.c.bf16 %v542, %v534
    %v655 = vpack.c.bf16 %v543, %v535
    %v656 = vpack.c.bf16 %v544, %v536
    %v657 = vpack.c.bf16 %v545, %v537
    %v658 = vpack.c.bf16 %v546, %v538
    %v659 = vpack.c.bf16 %v547, %v539
    %v660 = vpack.c.bf16 %v548, %v540
    %v661 = vpack.c.bf16 %v557, %v549
    %v662 = vpack.c.bf16 %v558, %v550
    %v663 = vpack.c.bf16 %v559, %v551
    %v664 = vpack.c.bf16 %v560, %v552
    %v665 = vpack.c.bf16 %v561, %v553
    %v666 = vpack.c.bf16 %v562, %v554
    %v667 = vpack.c.bf16 %v563, %v555
    %v668 = vpack.c.bf16 %v564, %v556
    %v669 = vpack.c.bf16 %v573, %v565
    %v670 = vpack.c.bf16 %v574, %v566
    %v671 = vpack.c.bf16 %v575, %v567
    %v672 = vpack.c.bf16 %v576, %v568
    %v673 = vpack.c.bf16 %v577, %v569
    %v674 = vpack.c.bf16 %v578, %v570
    %v675 = vpack.c.bf16 %v579, %v571
    %v676 = vpack.c.bf16 %v580, %v572
    %v677 = vpack.c.bf16 %v589, %v581
    %v678 = vpack.c.bf16 %v590, %v582
    %v679 = vpack.c.bf16 %v591, %v583
    %v680 = vpack.c.bf16 %v592, %v584
    %v681 = vpack.c.bf16 %v593, %v585
    %v682 = vpack.c.bf16 %v594, %v586
    %v683 = vpack.c.bf16 %v595, %v587
    %v684 = vpack.c.bf16 %v596, %v588
    %v685 = vpack.c.bf16 %v605, %v597
    %v686 = vpack.c.bf16 %v606, %v598
    %v687 = vpack.c.bf16 %v607, %v599
    %v688 = vpack.c.bf16 %v608, %v600
    %v689 = vpack.c.bf16 %v609, %v601
    %v690 = vpack.c.bf16 %v610, %v602
    %v691 = vpack.c.bf16 %v611, %v603
    %v692 = vpack.c.bf16 %v612, %v604
    %v693 = vpack.c.bf16 %v621, %v613
    %v694 = vpack.c.bf16 %v622, %v614
    %v695 = vpack.c.bf16 %v623, %v615
    %v696 = vpack.c.bf16 %v624, %v616
    %v697 = vpack.c.bf16 %v625, %v617
    %v698 = vpack.c.bf16 %v626, %v618
    %v699 = vpack.c.bf16 %v627, %v619
    %v700 = vpack.c.bf16 %v628, %v620
    %v701 = vpack.c.bf16 %v637, %v629
    %v702 = vpack.c.bf16 %v638, %v630
    %v703 = vpack.c.bf16 %v639, %v631
    %v704 = vpack.c.bf16 %v640, %v632
    %v705 = vpack.c.bf16 %v641, %v633
    %v706 = vpack.c.bf16 %v642, %v634
    %v707 = vpack.c.bf16 %v643, %v635
    %v708 = vpack.c.bf16 %v644, %v636
    %709 = vmatprep.subr.bf16.mxu0 %v646
    %710 = vmatpush1.bf16.xpose.msra.mxu0 %v645
    %711 = vmatprep.subr.bf16.mxu0 %v654
    %712 = vmatpush1.bf16.xpose.msra.mxu0 %v653
    %713 = vmatprep.subr.bf16.mxu0 %v662
    %714 = vmatpush1.bf16.xpose.msra.mxu0 %v661
    %715 = vmatprep.subr.bf16.mxu0 %v670
    %716 = vmatpush1.bf16.xpose.msra.mxu0 %v669
    %717 = vmatprep.subr.bf16.mxu0 %v678
    %718 = vmatpush1.bf16.xpose.msra.mxu0 %v677
    %719 = vmatprep.subr.bf16.mxu0 %v686
    %720 = vmatpush1.bf16.xpose.msra.mxu0 %v685
    %721 = vmatprep.subr.bf16.mxu0 %v694
    %722 = vmatpush1.bf16.xpose.msra.mxu0 %v693
    %723 = vmatprep.subr.bf16.mxu0 %v702
    %724 = vmatpush1.bf16.xpose.msra.mxu0 %v701
    %725 = vmatprep.subr.bf16.mxu0 0
    %726 = vmatpush1.bf16.xpose.msra.mxu0 0
    %727 = vmatprep.subr.bf16.mxu0 0
    %728 = vmatpush1.bf16.xpose.msra.mxu0 0
    %729 = vmatprep.subr.bf16.mxu0 0
    %730 = vmatpush1.bf16.xpose.msra.mxu0 0
    %731 = vmatprep.subr.bf16.mxu0 0
    %732 = vmatpush1.bf16.xpose.msra.mxu0 0
    %733 = vmatprep.subr.bf16.mxu0 0
    %734 = vmatpush1.bf16.xpose.msra.mxu0 0
    %735 = vmatprep.subr.bf16.mxu0 0
    %736 = vmatpush1.bf16.xpose.msra.mxu0 0
    %737 = vmatprep.subr.bf16.mxu0 0
    %738 = vmatpush1.bf16.xpose.msra.mxu0 0
    %739 = vmatprep.subr.bf16.mxu0 0
    %740 = vmatpush1.bf16.xpose.msra.mxu0 0
    %741 = vmatprep.mubr.bf16.mxu0 %v78
    %742 = vmatmul.mubr.bf16.gmra.mrb[0].mxu0 %v77
    %v743 = vpop.f32.mrb[0].mxu0
    %v744 = vadd.f32 0.0, %v743
    %v745 = vpop.f32.mrb[0].mxu0
    %v746 = vpop.f32.mrb[0].mxu0
    %v747 = vpop.f32.mrb[0].mxu0
    %748 = vdwg.mxu0
    %749 = vmatprep.subr.bf16.mxu0 %v648
    %750 = vmatpush1.bf16.xpose.msra.mxu0 %v647
    %751 = vmatprep.subr.bf16.mxu0 %v656
    %752 = vmatpush1.bf16.xpose.msra.mxu0 %v655
    %753 = vmatprep.subr.bf16.mxu0 %v664
    %754 = vmatpush1.bf16.xpose.msra.mxu0 %v663
    %755 = vmatprep.subr.bf16.mxu0 %v672
    %756 = vmatpush1.bf16.xpose.msra.mxu0 %v671
    %757 = vmatprep.subr.bf16.mxu0 %v680
    %758 = vmatpush1.bf16.xpose.msra.mxu0 %v679
    %759 = vmatprep.subr.bf16.mxu0 %v688
    %760 = vmatpush1.bf16.xpose.msra.mxu0 %v687
    %761 = vmatprep.subr.bf16.mxu0 %v696
    %762 = vmatpush1.bf16.xpose.msra.mxu0 %v695
    %763 = vmatprep.subr.bf16.mxu0 %v704
    %764 = vmatpush1.bf16.xpose.msra.mxu0 %v703
    %765 = vmatprep.subr.bf16.mxu0 0
    %766 = vmatpush1.bf16.xpose.msra.mxu0 0
    %767 = vmatprep.subr.bf16.mxu0 0
    %768 = vmatpush1.bf16.xpose.msra.mxu0 0
    %769 = vmatprep.subr.bf16.mxu0 0
    %770 = vmatpush1.bf16.xpose.msra.mxu0 0
    %771 = vmatprep.subr.bf16.mxu0 0
    %772 = vmatpush1.bf16.xpose.msra.mxu0 0
    %773 = vmatprep.subr.bf16.mxu0 0
    %774 = vmatpush1.bf16.xpose.msra.mxu0 0
    %775 = vmatprep.subr.bf16.mxu0 0
    %776 = vmatpush1.bf16.xpose.msra.mxu0 0
    %777 = vmatprep.subr.bf16.mxu0 0
    %778 = vmatpush1.bf16.xpose.msra.mxu0 0
    %779 = vmatprep.subr.bf16.mxu0 0
    %780 = vmatpush1.bf16.xpose.msra.mxu0 0
    %781 = vmatprep.mubr.bf16.mxu0 %v80
    %782 = vmatmul.mubr.bf16.gmra.mrb[0].mxu0 %v79
    %v783 = vpop.f32.mrb[0].mxu0
    %v784 = vadd.f32 %v744, %v783
    %v785 = vpop.f32.mrb[0].mxu0
    %v786 = vpop.f32.mrb[0].mxu0
    %v787 = vpop.f32.mrb[0].mxu0
    %788 = vdwg.mxu0
    %789 = vmatprep.subr.bf16.mxu0 %v650
    %790 = vmatpush1.bf16.xpose.msra.mxu0 %v649
    %791 = vmatprep.subr.bf16.mxu0 %v658
    %792 = vmatpush1.bf16.xpose.msra.mxu0 %v657
    %793 = vmatprep.subr.bf16.mxu0 %v666
    %794 = vmatpush1.bf16.xpose.msra.mxu0 %v665
    %795 = vmatprep.subr.bf16.mxu0 %v674
    %796 = vmatpush1.bf16.xpose.msra.mxu0 %v673
    %797 = vmatprep.subr.bf16.mxu0 %v682
    %798 = vmatpush1.bf16.xpose.msra.mxu0 %v681
    %799 = vmatprep.subr.bf16.mxu0 %v690
    %800 = vmatpush1.bf16.xpose.msra.mxu0 %v689
    %801 = vmatprep.subr.bf16.mxu0 %v698
    %802 = vmatpush1.bf16.xpose.msra.mxu0 %v697
    %803 = vmatprep.subr.bf16.mxu0 %v706
    %804 = vmatpush1.bf16.xpose.msra.mxu0 %v705
    %805 = vmatprep.subr.bf16.mxu0 0
    %806 = vmatpush1.bf16.xpose.msra.mxu0 0
    %807 = vmatprep.subr.bf16.mxu0 0
    %808 = vmatpush1.bf16.xpose.msra.mxu0 0
    %809 = vmatprep.subr.bf16.mxu0 0
    %810 = vmatpush1.bf16.xpose.msra.mxu0 0
    %811 = vmatprep.subr.bf16.mxu0 0
    %812 = vmatpush1.bf16.xpose.msra.mxu0 0
    %813 = vmatprep.subr.bf16.mxu0 0
    %814 = vmatpush1.bf16.xpose.msra.mxu0 0
    %815 = vmatprep.subr.bf16.mxu0 0
    %816 = vmatpush1.bf16.xpose.msra.mxu0 0
    %817 = vmatprep.subr.bf16.mxu0 0
    %818 = vmatpush1.bf16.xpose.msra.mxu0 0
    %819 = vmatprep.subr.bf16.mxu0 0
    %820 = vmatpush1.bf16.xpose.msra.mxu0 0
    %821 = vmatprep.mubr.bf16.mxu0 %v82
    %822 = vmatmul.mubr.bf16.gmra.mrb[0].mxu0 %v81
    %v823 = vpop.f32.mrb[0].mxu0
    %v824 = vadd.f32 %v784, %v823
    %v825 = vpop.f32.mrb[0].mxu0
    %v826 = vpop.f32.mrb[0].mxu0
    %v827 = vpop.f32.mrb[0].mxu0
    %828 = vdwg.mxu0
    %829 = vmatprep.subr.bf16.mxu0 %v652
    %830 = vmatpush1.bf16.xpose.msra.mxu0 %v651
    %831 = vmatprep.subr.bf16.mxu0 %v660
    %832 = vmatpush1.bf16.xpose.msra.mxu0 %v659
    %833 = vmatprep.subr.bf16.mxu0 %v668
    %834 = vmatpush1.bf16.xpose.msra.mxu0 %v667
    %835 = vmatprep.subr.bf16.mxu0 %v676
    %836 = vmatpush1.bf16.xpose.msra.mxu0 %v675
    %837 = vmatprep.subr.bf16.mxu0 %v684
    %838 = vmatpush1.bf16.xpose.msra.mxu0 %v683
    %839 = vmatprep.subr.bf16.mxu0 %v692
    %840 = vmatpush1.bf16.xpose.msra.mxu0 %v691
    %841 = vmatprep.subr.bf16.mxu0 %v700
    %842 = vmatpush1.bf16.xpose.msra.mxu0 %v699
    %843 = vmatprep.subr.bf16.mxu0 %v708
    %844 = vmatpush1.bf16.xpose.msra.mxu0 %v707
    %845 = vmatprep.subr.bf16.mxu0 0
    %846 = vmatpush1.bf16.xpose.msra.mxu0 0
    %847 = vmatprep.subr.bf16.mxu0 0
    %848 = vmatpush1.bf16.xpose.msra.mxu0 0
    %849 = vmatprep.subr.bf16.mxu0 0
    %850 = vmatpush1.bf16.xpose.msra.mxu0 0
    %851 = vmatprep.subr.bf16.mxu0 0
    %852 = vmatpush1.bf16.xpose.msra.mxu0 0
    %853 = vmatprep.subr.bf16.mxu0 0
    %854 = vmatpush1.bf16.xpose.msra.mxu0 0
    %855 = vmatprep.subr.bf16.mxu0 0
    %856 = vmatpush1.bf16.xpose.msra.mxu0 0
    %857 = vmatprep.subr.bf16.mxu0 0
    %858 = vmatpush1.bf16.xpose.msra.mxu0 0
    %859 = vmatprep.subr.bf16.mxu0 0
    %860 = vmatpush1.bf16.xpose.msra.mxu0 0
    %861 = vmatprep.mubr.bf16.mxu0 %v84
    %862 = vmatmul.mubr.bf16.gmra.mrb[0].mxu0 %v83
    %v863 = vpop.f32.mrb[0].mxu0
    %v864 = vadd.f32 %v824, %v863
    %v865 = vpop.f32.mrb[0].mxu0
    %v866 = vpop.f32.mrb[0].mxu0
    %v867 = vpop.f32.mrb[0].mxu0
    %868 = vdwg.mxu0
    %v869 = vmul.f32 %v864, %v864
    %v870 = vsub.f32 1.0, %v869
    %v871 = vmax.f32 %v870, 0.0
    %v872 = vrsqrt.pop %v871
    %v873 = vmul.f32 %v871, %v872
    %vm874 = vcmp.eq.f32.partialorder %v871, inf
    %v875 = vsel %vm874, %v871, %v873
    %vm876 = vcmp.eq.f32.partialorder %v871, 0.0
    %v877 = vand.u32 %v871, 2147483648
    %v878 = vsel %vm876, %v877, %v875
    %v879 = vmul.f32 %v864, 0.9800666
    %v880 = vmul.f32 %v878, 0.19866933
    %v881 = vsub.f32 %v879, %v880
    %vm882 = vcmp.gt.f32.partialorder %v864, -0.9800666
    %v883 = vsub.f32 %v864, 0.039733864
    %v884 = vsel %vm882, %v881, %v883
    %v885 = vlaneseq
    %v886 = vand.u32 %v885, 127
    %s887 = smul.u32 0, 128
    %v888 = vstv %s887
    %v889 = vadd.s32 %v886, %v888
    %v890 = vld [vmem:[%s0] sm:$0xff]
    %891 = vset.pattern.permute.xlu0 0
    %892 = vperm.xlu0 %891, %v890
    %v893 = vpop.permute.xlu0 %892
    %vm894 = vcmp.eq.s32.totalorder %v889, %v893
    %v895 = vsel %vm894, %v884, %v864
    %v896 = vmul.f32 %v895, 64.0
    %897 = vst [vmem:[#allocation7] sm:$0xff] %v896
    // Predicated region
    $region22: #{tpu_custom_call.1} parent=1 // pred_check
      _
    $region23: #{tpu_custom_call.1} parent=1 // pred_check_branch
      %899 = sbr.rel (0) target = $region25
    $region24: #{tpu_custom_call.1} parent=1 // pred_region
      %s901 = ssub.s32 128, 128
      %902 = vsyncadd [#allocation4], %s901
      %s904 = sshll.u32 [#allocation7], 4
      %s905 = int_to_ptr.vmem [resolvable:$true] %s904
      %907 = dma.vmem_to_hbm [thread:$0]  %s905, 128, %s3, [#allocation4]
    $region25: #{tpu_custom_call.1} parent=1 // pred_fallthru
      _
    // Predicated region
    $region26: #{tpu_custom_call.1} parent=1 // pred_check
      _
    $region27: #{tpu_custom_call.1} parent=1 // pred_check_branch
      %909 = sbr.rel (0) target = $region29
    $region28: #{tpu_custom_call.1} parent=1 // pred_region
      %910 = dma.done [#allocation4], 128
    $region29: #{tpu_custom_call.1} parent=1 // pred_fallthru
      _
    %911 = vsyncpa [#allocation3], 1
    %912 = vsyncpa [#allocation6], 1
    %913 = vsyncpa [#allocation4], 1

</llo_original>
